<compile_context>
chip_gen: v7x
topology: tpu7x:2x2x1
jax: 0.10.0
libtpu: 0.0.40
codegen_flags: <defaults>
</compile_context>

<pallas_src>
import functools

import jax
import jax.numpy as jnp
from jax.experimental import pallas as pl
from jax.experimental.pallas import tpu as pltpu


def _ls_ce_kernel(pred_ref, tgt_ref, partial_ref, *, smoothing, n_total, block_rows):
    """One row-block: writes the partial sum of per-row smoothed CE losses."""
    i = pl.program_id(0)

    pred = pred_ref[...].astype(jnp.float32)          # (TN, C), f32 compute
    tgt = tgt_ref[...]                                # (TN, 1), i32
    tn, c = pred.shape

    # Numerically stable log-softmax pieces (no (TN, C) log_probs materialized).
    m = jnp.max(pred, axis=1, keepdims=True)                               # (TN, 1)
    shifted = pred - m                                                     # (TN, C)
    lse = jnp.log(jnp.sum(jnp.exp(shifted), axis=1, keepdims=True))        # (TN, 1)

    # sum_c log_probs = sum_c shifted - C * lse
    sum_shifted = jnp.sum(shifted, axis=1, keepdims=True)                  # (TN, 1)

    # log_prob at the target class = shifted[target] - lse (iota-compare gather).
    classes = jax.lax.broadcasted_iota(jnp.int32, (tn, c), 1)
    shifted_at_tgt = jnp.sum(
        jnp.where(classes == tgt, shifted, 0.0), axis=1, keepdims=True)    # (TN, 1)

    logp_tgt = shifted_at_tgt - lse
    sum_logp = sum_shifted - c * lse
    per_row = (-(1.0 - smoothing)) * logp_tgt - (smoothing / c) * sum_logp  # (TN, 1)

    # Mask rows padded in the final grid block. Use `where`, not multiply, so
    # garbage (possibly NaN/inf) padded rows cannot poison the sum.
    row_ids = i * block_rows + jax.lax.broadcasted_iota(jnp.int32, (tn, 1), 0)
    per_row = jnp.where(row_ids < n_total, per_row, 0.0)

    partial_ref[...] = jnp.sum(per_row).reshape(1, 1, 1)


def _choose_block_rows(n, c, itemsize):
    """Largest row-tile that keeps double-buffered inputs + f32 temps in VMEM."""
    budget = 40 * 1024 * 1024  # conservative for v7x's 64 MiB physical VMEM
    # 2x native-dtype input (double-buffered) + ~4 live f32 (TN, C) temporaries.
    per_row_bytes = max(c * (2 * itemsize + 4 * 4), 1)
    tn = max(8, min(1024, budget // per_row_bytes))
    tn = (tn // 8) * 8
    if n <= tn:
        return n          # full-dim block: no (8,128) divisibility requirement
    return tn


def label_smoothing_cross_entropy(pred, target, smoothing=0.1, block_rows=None):
    """pred: (N, C) float, target: (N,) int -> scalar f32 loss."""
    n, c = pred.shape
    tgt2d = target.astype(jnp.int32).reshape(n, 1)

    if block_rows is None:
        block_rows = _choose_block_rows(n, c, pred.dtype.itemsize)
    tn = int(block_rows)
    grid = pl.cdiv(n, tn)

    kernel = functools.partial(
        _ls_ce_kernel, smoothing=float(smoothing), n_total=n, block_rows=tn)

    cost = pl.CostEstimate(
        flops=5 * n * c,
        transcendentals=n * c,
        bytes_accessed=n * c * pred.dtype.itemsize + n * 4 + grid * 4,
    )

    partials = pl.pallas_call(
        kernel,
        out_shape=jax.ShapeDtypeStruct((grid, 1, 1), jnp.float32),
        grid=(grid,),
        in_specs=[
            pl.BlockSpec((tn, c), lambda i: (i, 0)),   # pred, native dtype on the wire
            pl.BlockSpec((tn, 1), lambda i: (i, 0)),   # target indices
        ],
        out_specs=pl.BlockSpec((1, 1, 1), lambda i: (i, 0, 0)),
        compiler_params=pltpu.CompilerParams(
            dimension_semantics=("parallel",),
            vmem_limit_bytes=48 << 20,
        ),
        cost_estimate=cost,
    )(pred, tgt2d)

    return jnp.sum(partials) / jnp.float32(n)


def _reference(pred, target, smoothing=0.1):
    n, c = pred.shape
    one_hot = jax.nn.one_hot(target, c, dtype=jnp.float32)
    smooth = one_hot * (1.0 - smoothing) + smoothing / c
    logp = jax.nn.log_softmax(pred.astype(jnp.float32), axis=1)
    return jnp.mean(jnp.sum(-smooth * logp, axis=1))


if __name__ == "__main__":
    key = jax.random.PRNGKey(0)
    k1, k2, k3, k4 = jax.random.split(key, 4)

    # Case 1: small, single-block (matches the module's toy usage).
    N, C = 8, 32
    pred = jax.random.normal(k1, (N, C), dtype=jnp.float32)
    target = jax.random.randint(k2, (N,), 0, C, dtype=jnp.int32)
    loss = label_smoothing_cross_entropy(pred, target, smoothing=0.1)
    jax.block_until_ready(loss)
    ref = _reference(pred, target, smoothing=0.1)
    assert jnp.allclose(loss, ref, atol=1e-5, rtol=1e-5), (loss, ref)

    # Case 2: multi-block grid with a padded final block (exercises masking).
    N2, C2, TN2 = 20, 32, 8
    pred2 = jax.random.normal(k3, (N2, C2), dtype=jnp.float32)
    target2 = jax.random.randint(k4, (N2,), 0, C2, dtype=jnp.int32)
    loss2 = label_smoothing_cross_entropy(pred2, target2, smoothing=0.1,
                                          block_rows=TN2)
    jax.block_until_ready(loss2)
    ref2 = _reference(pred2, target2, smoothing=0.1)
    assert jnp.allclose(loss2, ref2, atol=1e-5, rtol=1e-5), (loss2, ref2)

    print("KERNEL_OK")
</pallas_src>

<mosaic_0001>
module attributes {stable_mosaic.version = 11 : i64} {
  func.func @_ls_ce_kernel(%arg0: i32, %arg1: memref<8x32xf32, #tpu.memory_space<vmem>>, %arg2: memref<8x1xi32, #tpu.memory_space<vmem>>, %arg3: memref<1x1x1xf32, #tpu.memory_space<vmem>>) attributes {dimension_semantics = [#tpu.dimension_semantics<parallel>], iteration_bounds = array<i64: 1>, scalar_prefetch = 0 : i64, scratch_operands = 0 : i64, tpu.core_type = #tpu.core_type<tc>, window_params = [{transform_indices = @transform_0, window_bounds = array<i64: 8, 32>}, {transform_indices = @transform_1, window_bounds = array<i64: 8, 1>}, {transform_indices = @transform_2, window_bounds = array<i64: 1, 1, 1>}]} {
    %c0 = arith.constant 0 : index
    %c0_0 = arith.constant 0 : index
    %0 = vector.load %arg1[%c0, %c0_0] : memref<8x32xf32, #tpu.memory_space<vmem>>, vector<8x32xf32>
    %c0_1 = arith.constant 0 : index
    %c0_2 = arith.constant 0 : index
    %1 = vector.load %arg2[%c0_1, %c0_2] : memref<8x1xi32, #tpu.memory_space<vmem>>, vector<8x1xi32>
    %cst = arith.constant dense<0xFF800000> : vector<8xf32>
    %2 = vector.multi_reduction <maximumf>, %0, %cst [1] : vector<8x32xf32> to vector<8xf32>
    %3 = vector.shape_cast %2 : vector<8xf32> to vector<8x1xf32>
    %4 = vector.broadcast %3 : vector<8x1xf32> to vector<8x32xf32>
    %5 = arith.subf %0, %4 : vector<8x32xf32>
    %6 = math.exp %5 : vector<8x32xf32>
    %cst_3 = arith.constant dense<0.000000e+00> : vector<8xf32>
    %7 = vector.multi_reduction <add>, %6, %cst_3 [1] : vector<8x32xf32> to vector<8xf32>
    %8 = vector.shape_cast %7 : vector<8xf32> to vector<8x1xf32>
    %9 = math.log %8 : vector<8x1xf32>
    %cst_4 = arith.constant dense<0.000000e+00> : vector<8xf32>
    %10 = vector.multi_reduction <add>, %5, %cst_4 [1] : vector<8x32xf32> to vector<8xf32>
    %11 = vector.shape_cast %10 : vector<8xf32> to vector<8x1xf32>
    %12 = tpu.iota {dimensions = array<i32: 1>} : vector<8x32xi32>
    %13 = vector.broadcast %1 : vector<8x1xi32> to vector<8x32xi32>
    %14 = arith.cmpi eq, %12, %13 : vector<8x32xi32>
    %cst_5 = arith.constant 0.000000e+00 : f32
    %15 = vector.broadcast %cst_5 : f32 to vector<8x32xf32>
    %16 = arith.select %14, %5, %15 : vector<8x32xi1>, vector<8x32xf32>
    %cst_6 = arith.constant dense<0.000000e+00> : vector<8xf32>
    %17 = vector.multi_reduction <add>, %16, %cst_6 [1] : vector<8x32xf32> to vector<8xf32>
    %18 = vector.shape_cast %17 : vector<8xf32> to vector<8x1xf32>
    %19 = arith.subf %18, %9 : vector<8x1xf32>
    %cst_7 = arith.constant 3.200000e+01 : f32
    %20 = vector.broadcast %cst_7 : f32 to vector<8x1xf32>
    %21 = arith.mulf %20, %9 : vector<8x1xf32>
    %22 = arith.subf %11, %21 : vector<8x1xf32>
    %cst_8 = arith.constant -0.899999976 : f32
    %23 = vector.broadcast %cst_8 : f32 to vector<8x1xf32>
    %24 = arith.mulf %23, %19 : vector<8x1xf32>
    %cst_9 = arith.constant 3.125000e-03 : f32
    %25 = vector.broadcast %cst_9 : f32 to vector<8x1xf32>
    %26 = arith.mulf %25, %22 : vector<8x1xf32>
    %27 = arith.subf %24, %26 : vector<8x1xf32>
    %c8_i32 = arith.constant 8 : i32
    %28 = arith.muli %arg0, %c8_i32 : i32
    %29 = tpu.iota {dimensions = array<i32: 0>} : vector<8x1xi32>
    %30 = vector.broadcast %28 : i32 to vector<8x1xi32>
    %31 = arith.addi %30, %29 : vector<8x1xi32>
    %c8_i32_10 = arith.constant 8 : i32
    %32 = vector.broadcast %c8_i32_10 : i32 to vector<8x1xi32>
    %33 = arith.cmpi slt, %31, %32 : vector<8x1xi32>
    %cst_11 = arith.constant 0.000000e+00 : f32
    %34 = vector.broadcast %cst_11 : f32 to vector<8x1xf32>
    %35 = arith.select %33, %27, %34 : vector<8x1xi1>, vector<8x1xf32>
    %36 = vector.shape_cast %35 : vector<8x1xf32> to vector<1x8x1xf32>
    %cst_12 = arith.constant dense<0.000000e+00> : vector<1xf32>
    %37 = vector.multi_reduction <add>, %36, %cst_12 [1, 2] : vector<1x8x1xf32> to vector<1xf32>
    %38 = vector.shape_cast %37 : vector<1xf32> to vector<1x1x1xf32>
    %39 = vector.extract %38[0, 0, 0] : f32 from vector<1x1x1xf32>
    %40 = vector.broadcast %39 : f32 to vector<1x1x1xf32>
    %c0_13 = arith.constant 0 : index
    %c0_14 = arith.constant 0 : index
    %c0_15 = arith.constant 0 : index
    %41 = vector.load %arg3[%c0_13, %c0_14, %c0_15] : memref<1x1x1xf32, #tpu.memory_space<vmem>>, vector<1x1x1xf32>
    tpu.vector_store %arg3[%c0_13, %c0_14, %c0_15], %40 {strides = array<i32>} : memref<1x1x1xf32, #tpu.memory_space<vmem>>, vector<1x1x1xf32>,
    return
  }
  func.func @transform_0(%arg0: i32) -> (i32, i32) {
    %c0_i32 = arith.constant 0 : i32
    %c0_i32_0 = arith.constant 0 : i32
    return %arg0, %c0_i32 : i32, i32
  }
  func.func @transform_1(%arg0: i32) -> (i32, i32) {
    %c0_i32 = arith.constant 0 : i32
    %c0_i32_0 = arith.constant 0 : i32
    return %arg0, %c0_i32 : i32, i32
  }
  func.func @transform_2(%arg0: i32) -> (i32, i32, i32) {
    %c0_i32 = arith.constant 0 : i32
    %c0_i32_0 = arith.constant 0 : i32
    %c0_i32_1 = arith.constant 0 : i32
    return %arg0, %c0_i32, %c0_i32_0 : i32, i32, i32
  }
}

</mosaic_0001>

<llo_original>
// kernel: tpu_custom_call.1
$region0: #{tpu_custom_call.1}
  #allocation0 [shape = 'u32[]', space=smem, size = 0x4, offset = 0x4, fixed_abs, tag = 'smem constant byte address 0x4 - core index']
  #allocation1 [shape = 'u32[144,128]{1,0:T(1,128)}', space=vmem, size = 0x12000, scoped, tag = 'internal scratch']
  %s0 = inlined_call_operand.vmem [shape: f32[8,32], index: 0, kind: input, shape index: {}]
  %s1 = inlined_call_operand.vmem [shape: s32[8,1], index: 1, kind: input, shape index: {}]
  %s2 = inlined_call_operand.hbm [shape: f32[1,1,1], index: 2, kind: output, shape index: {}]
  %s3 = sld [smem:[#allocation0]]
  $region18: #{tpu_custom_call.1} parent=0
    _
  %s5 = ssub.s32 1, %s3
  %s6 = scalar_select 0, %s5, %s3
  $region1: #{tpu_custom_call.1} parent=0
    #allocation2 [shape = 'u8[512]{0}', space=vmem, size = 0x400, scoped, tag = 'output window, operand 0, single buffered']
    #allocation3 [shape = 's32[1]{0}', space=sflag, size = 0x4, scoped, tag = 'scoped memory for tpu_custom_call.1']
    %7 = vsyncpa [#allocation3], 0
    // Predicated region
    $region2: #{tpu_custom_call.1} parent=1 // pred_check
      _
    $region3: #{tpu_custom_call.1} parent=1 // pred_check_branch
      %9 = sbr.rel (0) target = $region5
    $region4: #{tpu_custom_call.1} parent=1 // pred_region
      _
    $region5: #{tpu_custom_call.1} parent=1 // pred_fallthru
      _
    // Predicated region
    $region6: #{tpu_custom_call.1} parent=1 // pred_check
      _
    $region7: #{tpu_custom_call.1} parent=1 // pred_check_branch
      %11 = sbr.rel (0) target = $region9
    $region8: #{tpu_custom_call.1} parent=1 // pred_region
      _
    $region9: #{tpu_custom_call.1} parent=1 // pred_fallthru
      _
    %v12 = vld [vmem:[%s0] sm:$0xff]
    %v13 = vld [vmem:[%s1] sm:$0xff]
    %vm14 = vcmask 261120
    %v15 = vsel %vm14, %v12, -inf
    %16 = vmax.xlane.f32.xlu0 %v15
    %v17 = vpop.xlane.xlu0 %16
    %v18 = vsub.f32 %v12, %v17
    %v19 = vmul.f32 %v18, 1.442695
    %v20 = vpow.pop %v19
    %v21 = vsel %vm14, %v20, 0.0
    %22 = vadd.xlane.f32.xlu0 %v21
    %v23 = vpop.xlane.xlu0 %22
    %v24 = vlog2.pop %v23
    %v25 = vmul.f32 %v24, 0.6931472
    %v26 = vsel %vm14, %v18, 0.0
    %27 = vadd.xlane.f32.xlu0 %v26
    %v28 = vpop.xlane.xlu0 %27
    %v29 = vlaneseq
    %v30 = vand.u32 %v29, 127
    %31 = vset.pattern.permute.xlu0 0
    %32 = vperm.xlu0 %31, %v13
    %v33 = vpop.permute.xlu0 %32
    %vm34 = vcmp.eq.s32.totalorder %v30, %v33
    %v35 = vsel %vm34, %v18, 0.0
    %v36 = vsel %vm14, %v35, 0.0
    %37 = vadd.xlane.f32.xlu0 %v36
    %v38 = vpop.xlane.xlu0 %37
    %v39 = vsub.f32 %v38, %v25
    %v40 = vmul.f32 %v25, 32.0
    %v41 = vsub.f32 %v28, %v40
    %v42 = vmul.f32 %v39, -0.9
    %v43 = vmul.f32 %v41, 0.003125
    %v44 = vsub.f32 %v42, %v43
    %s45 = smul.u32 0, 8
    %v46 = vlaneseq
    %v47 = vshrl.u32 %v46, 7
    %v48 = vstv %s45
    %v49 = vadd.s32 %v48, %v47
    %vm50 = vcmp.lt.s32.totalorder %v49, 8
    %v51 = vsel %vm50, %v44, 0.0
    %vm52 = vcmask 7168
    %v53 = vsel %vm52, %v51, 0.0
    %54 = vadd.xlane.f32.xlu0 %v53
    %v55 = vpop.xlane.xlu0 %54
    %v56 = vrot.slane %v55, 4
    %v57 = vadd.f32 %v55, %v56
    %v58 = vrot.slane %v57, 2
    %v59 = vadd.f32 %v57, %v58
    %v60 = vrot.slane %v59, 1
    %v61 = vadd.f32 %v59, %v60
    %s62 = vtos %v61
    %v63 = vstv %s62
    %vm64 = vcmask 0
    %65 = vst.msk [vmem:[#allocation2] sm:$0x1] %vm64, %v63
    // Predicated region
    $region10: #{tpu_custom_call.1} parent=1 // pred_check
      _
    $region11: #{tpu_custom_call.1} parent=1 // pred_check_branch
      %67 = sbr.rel (0) target = $region13
    $region12: #{tpu_custom_call.1} parent=1 // pred_region
      %s69 = ssub.s32 16, 16
      %70 = vsyncadd [#allocation3], %s69
      %s72 = sshll.u32 [#allocation2], 4
      %s73 = int_to_ptr.vmem [resolvable:$true] %s72
      %75 = dma.vmem_to_hbm [thread:$0]  %s73, 16, %s2, [#allocation3]
    $region13: #{tpu_custom_call.1} parent=1 // pred_fallthru
      _
    // Predicated region
    $region14: #{tpu_custom_call.1} parent=1 // pred_check
      _
    $region15: #{tpu_custom_call.1} parent=1 // pred_check_branch
      %77 = sbr.rel (0) target = $region17
    $region16: #{tpu_custom_call.1} parent=1 // pred_region
      %78 = dma.done [#allocation3], 16
    $region17: #{tpu_custom_call.1} parent=1 // pred_fallthru
      _
    %79 = vsyncpa [#allocation3], 1

</llo_original>
